<compile_context>
chip_gen: v7x
topology: tpu7x:2x2x1
jax: 0.10.0
libtpu: 0.0.40
codegen_flags: <defaults>
</compile_context>

<pallas_src>
import functools
import math

import jax
import jax.numpy as jnp
from jax.experimental import pallas as pl
from jax.experimental.pallas import tpu as pltpu

INV_SQRT2 = 1.0 / math.sqrt(2.0)
HAAR_LLL_SCALE = INV_SQRT2 ** 3          # one 1/sqrt(2) per reduced axis (D, H, W)


# ----------------------- device / generation aware defaults -----------------------
def _device_kind():
    try:
        return jax.devices()[0].device_kind.lower()
    except Exception:
        return ""


def _default_block_target_bytes():
    kind = _device_kind()
    if "v7" in kind:
        return 6 << 20           # v7x: only 64 MiB physical VMEM -> smaller blocks
    if "v6" in kind:
        return 14 << 20          # v6e: 128 MiB physical, scoped limit raised below
    if "v5" in kind or "v4" in kind:
        return 12 << 20
    return 8 << 20


def _default_kron_hw_limit(dtype):
    # On v5e/v4 the f32 MXU path is slow; keep the dense 0/1 matmul's arithmetic
    # intensity below the f32 ridge by routing larger H*W to the separable path.
    kind = _device_kind()
    if ("v5" in kind or "v4" in kind) and jnp.dtype(dtype).itemsize >= 4:
        return 512
    return 1024


def _sublane_tile(dtype):
    return {4: 8, 2: 16, 1: 32}.get(jnp.dtype(dtype).itemsize, 8)


def _vmem_limit_bytes(need_bytes):
    # Ceiling for Mosaic's scoped-VMEM check: what the chosen tiling needs + margin.
    return int(max(32 << 20, min(int(need_bytes) + (4 << 20), 112 << 20)))


# ----------------------------------- kernels -----------------------------------
def _make_kron_kernel(hw, g):
    """Each row holds g D-pairs, each pair stored as [slice0(hw), slice1(hw)].
    The D-pair fold runs on the VPU; the 2x2 H/W block sum is one lane-contracting
    matmul against a 0/1 block-diagonal matrix (exact scale applied in f32)."""
    def kernel(x_ref, l_ref, o_ref):
        x = x_ref[...]                                            # (tm, g*2*hw)
        parts = [x[:, (2 * k) * hw:(2 * k + 1) * hw] +
                 x[:, (2 * k + 1) * hw:(2 * k + 2) * hw]
                 for k in range(g)]
        xs = parts[0] if g == 1 else jnp.concatenate(parts, axis=1)   # (tm, g*hw)
        t = jnp.dot(xs, l_ref[...], preferred_element_type=jnp.float32)
        o_ref[...] = (t * HAAR_LLL_SCALE).astype(o_ref.dtype)
    return kernel


def _make_separable_kernel(w, tm):
    """Fallback for large H*W: D and H pair-sums are contiguous slice adds (no
    transposing contraction); only the W pair-sum uses the MXU."""
    def kernel(x_ref, lw_ref, o_ref):
        lw = lw_ref[...]                                          # (w, w//2)
        for i in range(tm):                       # static unroll, tm is capped small
            xd = x_ref[i, 0] + x_ref[i, 1]        # (th2, 2*w)  D-pair fold
            xh = xd[:, :w] + xd[:, w:]            # (th2, w)    H-pair fold
            t = jnp.dot(xh, lw, preferred_element_type=jnp.float32)
            o_ref[i] = (t * HAAR_LLL_SCALE).astype(o_ref.dtype)
    return kernel


# ------------------------------ combine matrices --------------------------------
def _grouped_combine_matrix(h, w, g, dtype):
    """(g*h*w, g*(h//2)*(w//2)) block-diagonal 0/1 matrix: column (k, h2, w2) sums
    the 2x2 spatial block (h2, w2) of group member k.  Entries are exact in any
    dtype; the residual (1/sqrt(2))^3 is applied once in f32 inside the kernel."""
    hw, hw4 = h * w, (h // 2) * (w // 2)
    hi = jnp.arange(hw) // w
    wi = jnp.arange(hw) % w
    col = (hi // 2) * (w // 2) + (wi // 2)
    base = (col[:, None] == jnp.arange(hw4)[None, :]).astype(dtype)   # (hw, hw4)
    if g == 1:
        return base
    return jnp.kron(jnp.eye(g, dtype=dtype), base)


def _pair_sum_matrix(n, dtype):
    rows = jnp.arange(n)[:, None]
    cols = jnp.arange(n // 2)[None, :]
    return ((rows // 2) == cols).astype(dtype)                        # (n, n//2)


# -------------------------------- tiling choosers --------------------------------
def _pick_group(hw4, m_total, cap=16):
    """Group g D-pairs per matmul row so the stored last dim is >= 128 lanes."""
    if hw4 >= 128:
        return 1
    want = min(-(-128 // hw4), cap, m_total)
    for g in range(want, 0, -1):
        if m_total % g == 0:
            return g
    return 1


def _pick_row_block(m_total, row_bytes, target_bytes, hard_mult, pref_mult,
                    cap=None):
    """Largest divisor of m_total that is a multiple of hard_mult (or the full
    extent) and fits the byte target, preferring >= 2 grid steps (megacore /
    pipelining), dtype sublane alignment, then >= 4 steps, then block size."""
    best_key, best = None, m_total
    for t in range(1, m_total + 1):
        if m_total % t:
            continue
        if t != m_total and t % hard_mult:
            continue
        if cap is not None and t != 1 and t > cap:
            continue
        steps = m_total // t
        fits = t * row_bytes <= target_bytes
        key = (fits, steps >= 2, t % pref_mult == 0, steps >= 4,
               t if fits else -t)
        if best_key is None or key > best_key:
            best_key, best = key, t
    return best


def _pick_h2_tile(h2, row_bytes, target_bytes):
    """H/2-row tile for the separable path; multiples of 8 keep (8,128) tiling."""
    if h2 * row_bytes <= target_bytes:
        return h2
    cands = [t for t in range(8, h2, 8) if h2 % t == 0]
    if not cands:
        return h2  # TODO(synk): H/2 has no multiple-of-8 divisor; single H block
    fitting = [t for t in cands if t * row_bytes <= target_bytes]
    return max(fitting) if fitting else min(cands)


# ------------------------------------- paths -------------------------------------
def _lll_kron_path(x, N, C, D, H, W, target_bytes):
    dtype = x.dtype
    isz = jnp.dtype(dtype).itemsize
    m_total = N * C * (D // 2)
    HW, hw4 = H * W, (H // 2) * (W // 2)

    g = _pick_group(hw4, m_total)
    mg = m_total // g
    row_bytes = g * 2 * HW * isz

    tm = _pick_row_block(mg, row_bytes, target_bytes,
                         hard_mult=8, pref_mult=_sublane_tile(dtype))
    grid = (mg // tm,)

    xf = x.reshape(mg, g * 2 * HW)               # free view of contiguous NCDHW
    l = _grouped_combine_matrix(H, W, g, dtype)  # (g*HW, g*hw4), 0/1 entries

    in_blk = tm * row_bytes
    out_blk = tm * g * hw4 * isz
    l_bytes = int(l.size) * isz
    need = 3 * in_blk + 2 * l_bytes + 6 * out_blk + (2 << 20)

    flops = 2 * mg * (g * HW) * (g * hw4) + m_total * HW
    bytes_accessed = (xf.size + mg * g * hw4) * isz + l_bytes

    out = pl.pallas_call(
        _make_kron_kernel(HW, g),
        out_shape=jax.ShapeDtypeStruct((mg, g * hw4), dtype),
        grid_spec=pltpu.PrefetchScalarGridSpec(
            num_scalar_prefetch=0,
            grid=grid,
            in_specs=[
                pl.BlockSpec((tm, g * 2 * HW), lambda i: (i, 0)),
                # Constant operand: same block every step -> fetched only once by
                # the pipeline.  TODO(synk): single-buffer it (pl.Buffered(1)) to
                # drop the second VMEM copy of L once that is safe everywhere.
                pl.BlockSpec((g * HW, g * hw4), lambda i: (0, 0)),
            ],
            out_specs=pl.BlockSpec((tm, g * hw4), lambda i: (i, 0)),
        ),
        compiler_params=pltpu.CompilerParams(
            dimension_semantics=("parallel",),
            vmem_limit_bytes=_vmem_limit_bytes(need)),
        cost_estimate=pl.CostEstimate(
            flops=int(flops), transcendentals=0,
            bytes_accessed=int(bytes_accessed)),
    )(xf, l)
    return out          # (mg, g*hw4) == contiguous (N, C, D/2, H/2, W/2)


def _lll_separable_path(x, N, C, D, H, W, target_bytes):
    dtype = x.dtype
    isz = jnp.dtype(dtype).itemsize
    m_total = N * C * (D // 2)
    H2, W2 = H // 2, W // 2

    xf = x.reshape(m_total, 2, H2, 2 * W)        # free view: rows are H-pairs
    lw = _pair_sum_matrix(W, dtype)              # (W, W/2) 0/1 pair-sum matrix
    # TODO(synk): for W > ~2048 the dense (W, W/2) pair matrix gets large; a
    # lane-strided add would be preferable there.

    h2_row_bytes = 2 * 2 * W * isz               # one H-pair across the D-pair
    th2 = _pick_h2_tile(H2, h2_row_bytes, target_bytes)
    tm = _pick_row_block(m_total, th2 * h2_row_bytes, target_bytes,
                         hard_mult=1, pref_mult=8, cap=16)
    grid = (m_total // tm, H2 // th2)

    in_blk = tm * th2 * h2_row_bytes
    out_blk = tm * th2 * W2 * isz
    lw_bytes = int(lw.size) * isz
    need = 3 * in_blk + 2 * lw_bytes + 6 * out_blk + (2 << 20)

    flops = 2 * m_total * H2 * W * W2 + 4 * m_total * H2 * W
    bytes_accessed = (xf.size + m_total * H2 * W2) * isz + lw_bytes

    out = pl.pallas_call(
        _make_separable_kernel(W, tm),
        out_shape=jax.ShapeDtypeStruct((m_total, H2, W2), dtype),
        grid_spec=pltpu.PrefetchScalarGridSpec(
            num_scalar_prefetch=0,
            grid=grid,
            in_specs=[
                pl.BlockSpec((tm, 2, th2, 2 * W), lambda i, j: (i, 0, j, 0)),
                pl.BlockSpec((W, W2), lambda i, j: (0, 0)),
            ],
            out_specs=pl.BlockSpec((tm, th2, W2), lambda i, j: (i, j, 0)),
        ),
        compiler_params=pltpu.CompilerParams(
            dimension_semantics=("parallel", "parallel"),
            vmem_limit_bytes=_vmem_limit_bytes(need)),
        cost_estimate=pl.CostEstimate(
            flops=int(flops), transcendentals=0,
            bytes_accessed=int(bytes_accessed)),
    )(xf, lw)
    # TODO(synk): if W/2 < 128 the stored last dim is narrow (masked stores); a
    # lane-merged (th2*W2) output layout would help but is rarely hit here.
    return out          # (m_total, H/2, W/2)


# ------------------------------- public wrapper ----------------------------------
def wavelet_transform_3d(x, *, block_target_bytes=None, kron_hw_limit=None):
    """3D Haar DWT keeping only the low-pass ('aaa') band, matching the PyTorch
    module's forward.  x: (N, C, D, H, W) with even D, H, W."""
    N, C, D, H, W = x.shape
    assert D % 2 == 0 and H % 2 == 0 and W % 2 == 0, "even spatial sizes required"
    # TODO(synk): odd sizes / pywt symmetric boundary extension not implemented.

    if block_target_bytes is None:
        block_target_bytes = _default_block_target_bytes()
    if kron_hw_limit is None:
        kron_hw_limit = _default_kron_hw_limit(x.dtype)

    D2, H2, W2 = D // 2, H // 2, W // 2
    if H * W <= kron_hw_limit:
        out = _lll_kron_path(x, N, C, D, H, W, block_target_bytes)
    else:
        out = _lll_separable_path(x, N, C, D, H, W, block_target_bytes)

    out = out.reshape(N, C, D2, H2, W2)
    if C == 1:                      # matches the module's trailing `.squeeze(1)`
        out = out.reshape(N, D2, H2, W2)
    return out


def _reference(x):
    """Pure-JAX reference: LLL band = 2x2x2 block sum * (1/sqrt(2))^3."""
    N, C, D, H, W = x.shape
    xr = x.astype(jnp.float32).reshape(N, C, D // 2, 2, H // 2, 2, W // 2, 2)
    out = (xr.sum(axis=(3, 5, 7)) * HAAR_LLL_SCALE).astype(x.dtype)
    if C == 1:
        out = out.reshape(N, D // 2, H // 2, W // 2)
    return out


if __name__ == "__main__":
    root = jax.random.PRNGKey(0)
    k1, k2 = jax.random.split(root)

    # Main (kron) path: N=2, C=4, D=8, H=W=16.
    x = jax.random.normal(k1, (2, 4, 8, 16, 16), dtype=jnp.float32)
    y = jax.block_until_ready(wavelet_transform_3d(x))
    y_ref = _reference(x)
    assert y.shape == y_ref.shape, (y.shape, y_ref.shape)
    assert jnp.allclose(y, y_ref, atol=1e-5, rtol=1e-5), "kron path mismatch"

    # Separable fallback path (forced via kron_hw_limit) + C == 1 squeeze path.
    x2 = jax.random.normal(k2, (2, 1, 4, 32, 16), dtype=jnp.float32)
    y2 = jax.block_until_ready(wavelet_transform_3d(x2, kron_hw_limit=64))
    y2_ref = _reference(x2)
    assert y2.shape == y2_ref.shape, (y2.shape, y2_ref.shape)
    assert jnp.allclose(y2, y2_ref, atol=1e-5, rtol=1e-5), "separable path mismatch"

    print("KERNEL_OK")
</pallas_src>

<mosaic_0001>
module attributes {stable_mosaic.version = 11 : i64} {
  func.func @kernel(%arg0: i32, %arg1: memref<8x1024xf32, #tpu.memory_space<vmem>>, %arg2: memref<512x128xf32, #tpu.memory_space<vmem>>, %arg3: memref<8x128xf32, #tpu.memory_space<vmem>>) attributes {dimension_semantics = [#tpu.dimension_semantics<parallel>], iteration_bounds = array<i64: 2>, scalar_prefetch = 0 : i64, scratch_operands = 0 : i64, tpu.core_type = #tpu.core_type<tc>, window_params = [{transform_indices = @transform_0, window_bounds = array<i64: 8, 1024>}, {pipeline_mode = #tpu.pipeline_mode<synchronous>, transform_indices = @transform_1, window_bounds = array<i64: 512, 128>}, {transform_indices = @transform_2, window_bounds = array<i64: 8, 128>}]} {
    %c0 = arith.constant 0 : index
    %c0_0 = arith.constant 0 : index
    %0 = vector.load %arg1[%c0, %c0_0] : memref<8x1024xf32, #tpu.memory_space<vmem>>, vector<8x1024xf32>
    %1 = vector.extract_strided_slice %0 {offsets = [0, 0], sizes = [8, 256], strides = [1, 1]} : vector<8x1024xf32> to vector<8x256xf32>
    %2 = vector.extract_strided_slice %0 {offsets = [0, 256], sizes = [8, 256], strides = [1, 1]} : vector<8x1024xf32> to vector<8x256xf32>
    %3 = arith.addf %1, %2 : vector<8x256xf32>
    %4 = vector.extract_strided_slice %0 {offsets = [0, 512], sizes = [8, 256], strides = [1, 1]} : vector<8x1024xf32> to vector<8x256xf32>
    %5 = vector.extract_strided_slice %0 {offsets = [0, 768], sizes = [8, 256], strides = [1, 1]} : vector<8x1024xf32> to vector<8x256xf32>
    %6 = arith.addf %4, %5 : vector<8x256xf32>
    %7 = tpu.concatenate %3, %6 in 1 : vector<8x256xf32>, vector<8x256xf32> -> vector<8x512xf32>
    %c0_1 = arith.constant 0 : index
    %c0_2 = arith.constant 0 : index
    %8 = vector.load %arg2[%c0_1, %c0_2] : memref<512x128xf32, #tpu.memory_space<vmem>>, vector<512x128xf32>
    %cst = arith.constant dense<0.000000e+00> : vector<8x128xf32>
    %9 = tpu.matmul %7, %8, %cst {dimension_numbers = #tpu.dot_dimension_numbers<[1], [0], [0], [1], [0, 0, 1, 1], [], []>} : vector<8x512xf32>, vector<512x128xf32>, vector<8x128xf32> -> vector<8x128xf32>
    %cst_3 = arith.constant 0.353553385 : f32
    %10 = vector.broadcast %cst_3 : f32 to vector<8x128xf32>
    %11 = arith.mulf %9, %10 : vector<8x128xf32>
    %c0_4 = arith.constant 0 : index
    %c0_5 = arith.constant 0 : index
    %12 = vector.load %arg3[%c0_4, %c0_5] : memref<8x128xf32, #tpu.memory_space<vmem>>, vector<8x128xf32>
    tpu.vector_store %arg3[%c0_4, %c0_5], %11 {strides = array<i32>} : memref<8x128xf32, #tpu.memory_space<vmem>>, vector<8x128xf32>,
    return
  }
  func.func @transform_0(%arg0: i32) -> (i32, i32) {
    %c0_i32 = arith.constant 0 : i32
    %c0_i32_0 = arith.constant 0 : i32
    return %arg0, %c0_i32 : i32, i32
  }
  func.func @transform_1(%arg0: i32) -> (i32, i32) {
    %c0_i32 = arith.constant 0 : i32
    %c0_i32_0 = arith.constant 0 : i32
    %c0_i32_1 = arith.constant 0 : i32
    return %c0_i32, %c0_i32_0 : i32, i32
  }
  func.func @transform_2(%arg0: i32) -> (i32, i32) {
    %c0_i32 = arith.constant 0 : i32
    %c0_i32_0 = arith.constant 0 : i32
    return %arg0, %c0_i32 : i32, i32
  }
}

</mosaic_0001>

<llo_original>
// kernel: tpu_custom_call.1
$region0: #{tpu_custom_call.1}
  #allocation0 [shape = 'u32[]', space=smem, size = 0x4, offset = 0x4, fixed_abs, tag = 'smem constant byte address 0x4 - core index']
  #allocation1 [shape = 'u32[144,128]{1,0:T(1,128)}', space=vmem, size = 0x12000, scoped, tag = 'internal scratch']
  %s0 = inlined_call_operand.hbm [shape: f32[16,1024], index: 0, kind: input, shape index: {}]
  %s1 = inlined_call_operand.hbm [shape: f32[512,128], index: 1, kind: input, shape index: {}]
  %s2 = inlined_call_operand.hbm [shape: f32[16,128], index: 2, kind: output, shape index: {}]
  %s3 = sld [smem:[#allocation0]]
  $region49: #{tpu_custom_call.1} parent=0
    _
  %s5 = ssub.s32 1, %s3
  %s6 = scalar_select 0, %s5, %s3
  $region1: #{tpu_custom_call.1} parent=0
    #allocation2 [shape = 'u8[65536]{0}', space=vmem, size = 0x10000, scoped, tag = 'input window, operand 0']
    #allocation3 [shape = 's32[2]{0}', space=sflag, size = 0x8, scoped, tag = 'scoped memory for tpu_custom_call.1']
    #allocation4 [shape = 's32[2]{0}', space=sflag, size = 0x8, scoped, tag = 'scoped memory for tpu_custom_call.1']
    #allocation5 [shape = 'u8[262144]{0}', space=vmem, size = 0x40000, scoped, tag = 'input window, operand 1, single buffered']
    #allocation6 [shape = 's32[1]{0}', space=sflag, size = 0x4, scoped, tag = 'scoped memory for tpu_custom_call.1']
    #allocation7 [shape = 'u8[8192]{0}', space=vmem, size = 0x2000, scoped, tag = 'output window, operand 0']
    %7 = vsyncpa [#allocation3], 0
    %s8 = scalar_lea.sflag [#allocation3], 1
    %9 = vsyncpa %s8, 0
    %10 = vsyncpa [#allocation6], 0
    %11 = vsyncpa [#allocation4], 0
    %s12 = scalar_lea.sflag [#allocation4], 1
    %13 = vsyncpa %s12, 0
    loop: start=0, step=1, limit=4
    $region2: #{tpu_custom_call.1} parent=1 // loop_pre_header
      _
    $region3: #{tpu_custom_call.1} parent=1 // loop_header
      %s15 = sphi 0, %s19
      %p16 = scmp.ge.s32.totalorder %s15, 4
      %s25 = sphi 0, %s27
      %s28 = sphi 0, %s25
      %s29 = sphi 0, %s28
      %s45 = sphi 0, %s29
      %s49 = sphi 0, %s49
      %s51 = sphi 0, %s49
      %s52 = sphi 0, %s51
      %s66 = sphi 0, %s52
      %s72 = sphi 0, %s74
      %s75 = sphi 0, %s72
      %s76 = sphi 0, %s75
      %s92 = sphi 0, %s76
    $region4: #{tpu_custom_call.1} parent=1 // loop_header_branch
      %18 = sbr.rel (%p16) target = $region8
    $region5: #{tpu_custom_call.1} parent=1 // loop_body
      %s20 = ssub.s32 %s15, 1
      %s21 = ssub.s32 %s15, 2
      %s22 = sadd.s32 %s15, 1
      %s23 = ssub.s32 %s15, %s22
      %p24 = scmp.eq.s32.totalorder %s23, 0
      %s26 = sadd.s32 %s25, 1
      %s27 = scalar_select %p24, %s25, %s26
      %p30 = pneg %p24
      %p31 = scmp.eq.s32.totalorder %s15, 1
      %p32 = por %p30, %p31
      %p33 = scmp.ne.s32.totalorder %s25, %s28
      %p34 = scmp.eq.s32.totalorder %s15, 0
      %p35 = por %p33, %p34
      %p36 = scmp.ne.s32.totalorder %s25, %s28
      %p37 = scmp.eq.s32.totalorder %s20, 1
      %p38 = por %p36, %p37
      %p39 = scmp.ne.s32.totalorder %s28, %s29
      %p40 = scmp.eq.s32.totalorder %s20, 0
      %p41 = por %p39, %p40
      %p42 = scmp.ne.s32.totalorder %s28, %s29
      %p43 = scmp.eq.s32.totalorder %s21, 1
      %p44 = por %p42, %p43
      %p46 = scmp.ne.s32.totalorder %s29, %s45
      %p47 = scmp.eq.s32.totalorder %s21, 0
      %p48 = por %p46, %p47
      %s50 = sadd.s32 %s49, 1
      %p53 = scmp.eq.s32.totalorder %s15, 1
      %p54 = scmp.ne.s32.totalorder %s49, %s51
      %p55 = scmp.eq.s32.totalorder %s15, 0
      %p56 = por %p54, %p55
      %p57 = scmp.ne.s32.totalorder %s49, %s51
      %p58 = scmp.eq.s32.totalorder %s20, 1
      %p59 = por %p57, %p58
      %p60 = scmp.ne.s32.totalorder %s51, %s52
      %p61 = scmp.eq.s32.totalorder %s20, 0
      %p62 = por %p60, %p61
      %p63 = scmp.ne.s32.totalorder %s51, %s52
      %p64 = scmp.eq.s32.totalorder %s21, 1
      %p65 = por %p63, %p64
      %p67 = scmp.ne.s32.totalorder %s52, %s66
      %p68 = scmp.eq.s32.totalorder %s21, 0
      %p69 = por %p67, %p68
      %s70 = ssub.s32 %s15, %s22
      %p71 = scmp.eq.s32.totalorder %s70, 0
      %s73 = sadd.s32 %s72, 1
      %s74 = scalar_select %p71, %s72, %s73
      %p77 = pneg %p71
      %p78 = scmp.eq.s32.totalorder %s15, 1
      %p79 = por %p77, %p78
      %p80 = scmp.ne.s32.totalorder %s72, %s75
      %p81 = scmp.eq.s32.totalorder %s15, 0
      %p82 = por %p80, %p81
      %p83 = scmp.ne.s32.totalorder %s72, %s75
      %p84 = scmp.eq.s32.totalorder %s20, 1
      %p85 = por %p83, %p84
      %p86 = scmp.ne.s32.totalorder %s75, %s76
      %p87 = scmp.eq.s32.totalorder %s20, 0
      %p88 = por %p86, %p87
      %p89 = scmp.ne.s32.totalorder %s75, %s76
      %p90 = scmp.eq.s32.totalorder %s21, 1
      %p91 = por %p89, %p90
      %p93 = scmp.ne.s32.totalorder %s76, %s92
      %p94 = scmp.eq.s32.totalorder %s21, 0
      %p95 = por %p93, %p94
      %p96 = scmp.le.s32.totalorder 1, %s15
      %p97 = scmp.lt.s32.totalorder %s15, 3
      %p98 = pnand %p96, %p97
      %p99 = pneg %p98
      // Predicated region
      $region9: #{tpu_custom_call.1} parent=5 // pred_check
        _
      $region10: #{tpu_custom_call.1} parent=5 // pred_check_branch
        %101 = sbr.rel (%p98) target = $region12
      $region11: #{tpu_custom_call.1} parent=5 // pred_region
        %s102 = ssub.s32 %s15, 1
        // Predicated region
        $region13: #{tpu_custom_call.1} parent=11 // pred_check
          %p103 = pneg %p62
        $region14: #{tpu_custom_call.1} parent=11 // pred_check_branch
          %105 = sbr.rel (%p103) target = $region16
        $region15: #{tpu_custom_call.1} parent=11 // pred_region
          %s107 = ssub.s32 8192, 8192
          %108 = vsyncadd [#allocation6], %s107
          %s109 = sshll.u32 [#allocation5], 4
          %s110 = int_to_ptr.vmem [resolvable:$true] %s109
          %115 = dma.hbm_to_vmem [thread:$0]  %s1, 8192, %s110, [#allocation6], 128, 128, 8
        $region16: #{tpu_custom_call.1} parent=11 // pred_fallthru
          _
      $region12: #{tpu_custom_call.1} parent=5 // pred_fallthru
        _
      %p116 = scmp.lt.s32.totalorder %s15, 2
      // Predicated region
      $region17: #{tpu_custom_call.1} parent=5 // pred_check
        %p117 = pneg %p116
      $region18: #{tpu_custom_call.1} parent=5 // pred_check_branch
        %119 = sbr.rel (%p117) target = $region20
      $region19: #{tpu_custom_call.1} parent=5 // pred_region
        // Predicated region
        $region21: #{tpu_custom_call.1} parent=19 // pred_check
          %p120 = pneg %p35
        $region22: #{tpu_custom_call.1} parent=19 // pred_check_branch
          %122 = sbr.rel (%p120) target = $region24
        $region23: #{tpu_custom_call.1} parent=19 // pred_region
          %s123 = sand.u32 %s25, 1
          %s124 = scalar_lea.sflag [#allocation3], %s123
          %s125 = sand.u32 %s25, 1
          %s126 = smul.addr %s125, 64
          %s127 = scalar_lea.vmem [#allocation2], %s126
          %s129 = ssub.s32 1024, 1024
          %130 = vsyncadd %s124, %s129
          %s131 = smul.addr %s15, 8
          %s132 = smul.addr %s131, 128
          %s133 = scalar_lea.hbm %s0, %s132
          %s135 = sshll.u32 %s127, 4
          %s136 = int_to_ptr.vmem [resolvable:$true] %s135
          %138 = dma.hbm_to_vmem [thread:$0]  %s133, 1024, %s136, %s124
        $region24: #{tpu_custom_call.1} parent=19 // pred_fallthru
          _
      $region20: #{tpu_custom_call.1} parent=5 // pred_fallthru
        _
      %p139 = scmp.le.s32.totalorder 1, %s15
      %p140 = scmp.lt.s32.totalorder %s15, 3
      %p141 = pnand %p139, %p140
      %p142 = pneg %p141
      // Predicated region
      $region25: #{tpu_custom_call.1} parent=5 // pred_check
        _
      $region26: #{tpu_custom_call.1} parent=5 // pred_check_branch
        %144 = sbr.rel (%p141) target = $region28
      $region27: #{tpu_custom_call.1} parent=5 // pred_region
        %s145 = ssub.s32 %s15, 1
        %s146 = sand.u32 %s28, 1
        %s147 = scalar_lea.sflag [#allocation3], %s146
        %s148 = sand.u32 %s28, 1
        %s149 = smul.addr %s148, 64
        %s150 = scalar_lea.vmem [#allocation2], %s149
        // Predicated region
        $region29: #{tpu_custom_call.1} parent=27 // pred_check
          %p151 = pneg %p41
        $region30: #{tpu_custom_call.1} parent=27 // pred_check_branch
          %153 = sbr.rel (%p151) target = $region32
        $region31: #{tpu_custom_call.1} parent=27 // pred_region
          %154 = dma.done %s147, 1024
        $region32: #{tpu_custom_call.1} parent=27 // pred_fallthru
          _
        // Predicated region
        $region33: #{tpu_custom_call.1} parent=27 // pred_check
          %p155 = pneg %p62
        $region34: #{tpu_custom_call.1} parent=27 // pred_check_branch
          %157 = sbr.rel (%p155) target = $region36
        $region35: #{tpu_custom_call.1} parent=27 // pred_region
          %158 = dma.done [#allocation6], 8192
        $region36: #{tpu_custom_call.1} parent=27 // pred_fallthru
          _
        %s159 = sand.u32 %s28, 1
        %s160 = scalar_lea.sflag [#allocation3], %s159
        %s161 = sand.u32 %s28, 1
        %s162 = smul.addr %s161, 64
        %s163 = scalar_lea.vmem [#allocation2], %s162
        %p164 = pneg %p41
        %p165 = pneg %p38
        %p166 = pneg %p62
        %p167 = pneg %p59
        %p168 = pneg %p88
        %p169 = pneg %p85
        %s170 = sand.u32 %s75, 1
        %s171 = scalar_lea.sflag [#allocation4], %s170
        %s172 = sand.u32 %s75, 1
        %s173 = smul.addr %s172, 8
        %s174 = scalar_lea.vmem [#allocation7], %s173
        %v175 = vld [vmem:[%s150] sm:$0xff]
        %v176 = vld [vmem:[%s150 + $0x8] sm:$0xff]
        %v177 = vld [vmem:[%s150 + $0x10] sm:$0xff]
        %v178 = vld [vmem:[%s150 + $0x18] sm:$0xff]
        %v179 = vld [vmem:[%s150 + $0x20] sm:$0xff]
        %v180 = vld [vmem:[%s150 + $0x28] sm:$0xff]
        %v181 = vld [vmem:[%s150 + $0x30] sm:$0xff]
        %v182 = vld [vmem:[%s150 + $0x38] sm:$0xff]
        %v183 = vadd.f32 %v175, %v177
        %v184 = vadd.f32 %v176, %v178
        %v185 = vadd.f32 %v179, %v181
        %v186 = vadd.f32 %v180, %v182
        %v187 = vld [vmem:[#allocation5] sm:$0xff]
        %v188 = vld [vmem:[#allocation5 + $0x8] sm:$0xff]
        %v189 = vld [vmem:[#allocation5 + $0x10] sm:$0xff]
        %v190 = vld [vmem:[#allocation5 + $0x18] sm:$0xff]
        %v191 = vld [vmem:[#allocation5 + $0x20] sm:$0xff]
        %v192 = vld [vmem:[#allocation5 + $0x28] sm:$0xff]
        %v193 = vld [vmem:[#allocation5 + $0x30] sm:$0xff]
        %v194 = vld [vmem:[#allocation5 + $0x38] sm:$0xff]
        %v195 = vld [vmem:[#allocation5 + $0x40] sm:$0xff]
        %v196 = vld [vmem:[#allocation5 + $0x48] sm:$0xff]
        %v197 = vld [vmem:[#allocation5 + $0x50] sm:$0xff]
        %v198 = vld [vmem:[#allocation5 + $0x58] sm:$0xff]
        %v199 = vld [vmem:[#allocation5 + $0x60] sm:$0xff]
        %v200 = vld [vmem:[#allocation5 + $0x68] sm:$0xff]
        %v201 = vld [vmem:[#allocation5 + $0x70] sm:$0xff]
        %v202 = vld [vmem:[#allocation5 + $0x78] sm:$0xff]
        %v203 = vld [vmem:[#allocation5 + $0x80] sm:$0xff]
        %v204 = vld [vmem:[#allocation5 + $0x88] sm:$0xff]
        %v205 = vld [vmem:[#allocation5 + $0x90] sm:$0xff]
        %v206 = vld [vmem:[#allocation5 + $0x98] sm:$0xff]
        %v207 = vld [vmem:[#allocation5 + $0xa0] sm:$0xff]
        %v208 = vld [vmem:[#allocation5 + $0xa8] sm:$0xff]
        %v209 = vld [vmem:[#allocation5 + $0xb0] sm:$0xff]
        %v210 = vld [vmem:[#allocation5 + $0xb8] sm:$0xff]
        %v211 = vld [vmem:[#allocation5 + $0xc0] sm:$0xff]
        %v212 = vld [vmem:[#allocation5 + $0xc8] sm:$0xff]
        %v213 = vld [vmem:[#allocation5 + $0xd0] sm:$0xff]
        %v214 = vld [vmem:[#allocation5 + $0xd8] sm:$0xff]
        %v215 = vld [vmem:[#allocation5 + $0xe0] sm:$0xff]
        %v216 = vld [vmem:[#allocation5 + $0xe8] sm:$0xff]
        %v217 = vld [vmem:[#allocation5 + $0xf0] sm:$0xff]
        %v218 = vld [vmem:[#allocation5 + $0xf8] sm:$0xff]
        %v219 = vld [vmem:[#allocation5 + $0x100] sm:$0xff]
        %v220 = vld [vmem:[#allocation5 + $0x108] sm:$0xff]
        %v221 = vld [vmem:[#allocation5 + $0x110] sm:$0xff]
        %v222 = vld [vmem:[#allocation5 + $0x118] sm:$0xff]
        %v223 = vld [vmem:[#allocation5 + $0x120] sm:$0xff]
        %v224 = vld [vmem:[#allocation5 + $0x128] sm:$0xff]
        %v225 = vld [vmem:[#allocation5 + $0x130] sm:$0xff]
        %v226 = vld [vmem:[#allocation5 + $0x138] sm:$0xff]
        %v227 = vld [vmem:[#allocation5 + $0x140] sm:$0xff]
        %v228 = vld [vmem:[#allocation5 + $0x148] sm:$0xff]
        %v229 = vld [vmem:[#allocation5 + $0x150] sm:$0xff]
        %v230 = vld [vmem:[#allocation5 + $0x158] sm:$0xff]
        %v231 = vld [vmem:[#allocation5 + $0x160] sm:$0xff]
        %v232 = vld [vmem:[#allocation5 + $0x168] sm:$0xff]
        %v233 = vld [vmem:[#allocation5 + $0x170] sm:$0xff]
        %v234 = vld [vmem:[#allocation5 + $0x178] sm:$0xff]
        %v235 = vld [vmem:[#allocation5 + $0x180] sm:$0xff]
        %v236 = vld [vmem:[#allocation5 + $0x188] sm:$0xff]
        %v237 = vld [vmem:[#allocation5 + $0x190] sm:$0xff]
        %v238 = vld [vmem:[#allocation5 + $0x198] sm:$0xff]
        %v239 = vld [vmem:[#allocation5 + $0x1a0] sm:$0xff]
        %v240 = vld [vmem:[#allocation5 + $0x1a8] sm:$0xff]
        %v241 = vld [vmem:[#allocation5 + $0x1b0] sm:$0xff]
        %v242 = vld [vmem:[#allocation5 + $0x1b8] sm:$0xff]
        %v243 = vld [vmem:[#allocation5 + $0x1c0] sm:$0xff]
        %v244 = vld [vmem:[#allocation5 + $0x1c8] sm:$0xff]
        %v245 = vld [vmem:[#allocation5 + $0x1d0] sm:$0xff]
        %v246 = vld [vmem:[#allocation5 + $0x1d8] sm:$0xff]
        %v247 = vld [vmem:[#allocation5 + $0x1e0] sm:$0xff]
        %v248 = vld [vmem:[#allocation5 + $0x1e8] sm:$0xff]
        %v249 = vld [vmem:[#allocation5 + $0x1f0] sm:$0xff]
        %v250 = vld [vmem:[#allocation5 + $0x1f8] sm:$0xff]
        %251 = vmatprep.subr.mxu0 0.0
        %252 = vmatpush1.msra.mxu0 %v187
        %253 = vmatprep.subr.mxu0 0.0
        %254 = vmatpush1.msra.mxu0 %v188
        %255 = vmatprep.subr.mxu0 0.0
        %256 = vmatpush1.msra.mxu0 %v189
        %257 = vmatprep.subr.mxu0 0.0
        %258 = vmatpush1.msra.mxu0 %v190
        %259 = vmatprep.subr.mxu0 0.0
        %260 = vmatpush1.msra.mxu0 %v191
        %261 = vmatprep.subr.mxu0 0.0
        %262 = vmatpush1.msra.mxu0 %v192
        %263 = vmatprep.subr.mxu0 0.0
        %264 = vmatpush1.msra.mxu0 %v193
        %265 = vmatprep.subr.mxu0 0.0
        %266 = vmatpush1.msra.mxu0 %v194
        %267 = vmatprep.subr.mxu0 0.0
        %268 = vmatpush1.msra.mxu0 %v195
        %269 = vmatprep.subr.mxu0 0.0
        %270 = vmatpush1.msra.mxu0 %v196
        %271 = vmatprep.subr.mxu0 0.0
        %272 = vmatpush1.msra.mxu0 %v197
        %273 = vmatprep.subr.mxu0 0.0
        %274 = vmatpush1.msra.mxu0 %v198
        %275 = vmatprep.subr.mxu0 0.0
        %276 = vmatpush1.msra.mxu0 %v199
        %277 = vmatprep.subr.mxu0 0.0
        %278 = vmatpush1.msra.mxu0 %v200
        %279 = vmatprep.subr.mxu0 0.0
        %280 = vmatpush1.msra.mxu0 %v201
        %281 = vmatprep.subr.mxu0 0.0
        %282 = vmatpush1.msra.mxu0 %v202
        %283 = vmatprep.subr.mxu0 0.0
        %284 = vmatpush1.msra.mxu0 %v203
        %285 = vmatprep.subr.mxu0 0.0
        %286 = vmatpush1.msra.mxu0 %v204
        %287 = vmatprep.subr.mxu0 0.0
        %288 = vmatpush1.msra.mxu0 %v205
        %289 = vmatprep.subr.mxu0 0.0
        %290 = vmatpush1.msra.mxu0 %v206
        %291 = vmatprep.subr.mxu0 0.0
        %292 = vmatpush1.msra.mxu0 %v207
        %293 = vmatprep.subr.mxu0 0.0
        %294 = vmatpush1.msra.mxu0 %v208
        %295 = vmatprep.subr.mxu0 0.0
        %296 = vmatpush1.msra.mxu0 %v209
        %297 = vmatprep.subr.mxu0 0.0
        %298 = vmatpush1.msra.mxu0 %v210
        %299 = vmatprep.subr.mxu0 0.0
        %300 = vmatpush1.msra.mxu0 %v211
        %301 = vmatprep.subr.mxu0 0.0
        %302 = vmatpush1.msra.mxu0 %v212
        %303 = vmatprep.subr.mxu0 0.0
        %304 = vmatpush1.msra.mxu0 %v213
        %305 = vmatprep.subr.mxu0 0.0
        %306 = vmatpush1.msra.mxu0 %v214
        %307 = vmatprep.subr.mxu0 0.0
        %308 = vmatpush1.msra.mxu0 %v215
        %309 = vmatprep.subr.mxu0 0.0
        %310 = vmatpush1.msra.mxu0 %v216
        %311 = vmatprep.subr.mxu0 0.0
        %312 = vmatpush1.msra.mxu0 %v217
        %313 = vmatprep.subr.mxu0 0.0
        %314 = vmatpush1.msra.mxu0 %v218
        %315 = vmatprep.mubr.f32.mxu0 %v184
        %316 = vmatmul.mubr.f32.gmra.mrb[0].mxu0 %v183
        %v317 = vpop.f32.mrb[0].mxu0
        %v318 = vadd.f32 0.0, %v317
        %v319 = vpop.f32.mrb[0].mxu0
        %320 = vdwg.mxu0
        %321 = vmatprep.subr.mxu0 0.0
        %322 = vmatpush1.msra.mxu0 %v219
        %323 = vmatprep.subr.mxu0 0.0
        %324 = vmatpush1.msra.mxu0 %v220
        %325 = vmatprep.subr.mxu0 0.0
        %326 = vmatpush1.msra.mxu0 %v221
        %327 = vmatprep.subr.mxu0 0.0
        %328 = vmatpush1.msra.mxu0 %v222
        %329 = vmatprep.subr.mxu0 0.0
        %330 = vmatpush1.msra.mxu0 %v223
        %331 = vmatprep.subr.mxu0 0.0
        %332 = vmatpush1.msra.mxu0 %v224
        %333 = vmatprep.subr.mxu0 0.0
        %334 = vmatpush1.msra.mxu0 %v225
        %335 = vmatprep.subr.mxu0 0.0
        %336 = vmatpush1.msra.mxu0 %v226
        %337 = vmatprep.subr.mxu0 0.0
        %338 = vmatpush1.msra.mxu0 %v227
        %339 = vmatprep.subr.mxu0 0.0
        %340 = vmatpush1.msra.mxu0 %v228
        %341 = vmatprep.subr.mxu0 0.0
        %342 = vmatpush1.msra.mxu0 %v229
        %343 = vmatprep.subr.mxu0 0.0
        %344 = vmatpush1.msra.mxu0 %v230
        %345 = vmatprep.subr.mxu0 0.0
        %346 = vmatpush1.msra.mxu0 %v231
        %347 = vmatprep.subr.mxu0 0.0
        %348 = vmatpush1.msra.mxu0 %v232
        %349 = vmatprep.subr.mxu0 0.0
        %350 = vmatpush1.msra.mxu0 %v233
        %351 = vmatprep.subr.mxu0 0.0
        %352 = vmatpush1.msra.mxu0 %v234
        %353 = vmatprep.subr.mxu0 0.0
        %354 = vmatpush1.msra.mxu0 %v235
        %355 = vmatprep.subr.mxu0 0.0
        %356 = vmatpush1.msra.mxu0 %v236
        %357 = vmatprep.subr.mxu0 0.0
        %358 = vmatpush1.msra.mxu0 %v237
        %359 = vmatprep.subr.mxu0 0.0
        %360 = vmatpush1.msra.mxu0 %v238
        %361 = vmatprep.subr.mxu0 0.0
        %362 = vmatpush1.msra.mxu0 %v239
        %363 = vmatprep.subr.mxu0 0.0
        %364 = vmatpush1.msra.mxu0 %v240
        %365 = vmatprep.subr.mxu0 0.0
        %366 = vmatpush1.msra.mxu0 %v241
        %367 = vmatprep.subr.mxu0 0.0
        %368 = vmatpush1.msra.mxu0 %v242
        %369 = vmatprep.subr.mxu0 0.0
        %370 = vmatpush1.msra.mxu0 %v243
        %371 = vmatprep.subr.mxu0 0.0
        %372 = vmatpush1.msra.mxu0 %v244
        %373 = vmatprep.subr.mxu0 0.0
        %374 = vmatpush1.msra.mxu0 %v245
        %375 = vmatprep.subr.mxu0 0.0
        %376 = vmatpush1.msra.mxu0 %v246
        %377 = vmatprep.subr.mxu0 0.0
        %378 = vmatpush1.msra.mxu0 %v247
        %379 = vmatprep.subr.mxu0 0.0
        %380 = vmatpush1.msra.mxu0 %v248
        %381 = vmatprep.subr.mxu0 0.0
        %382 = vmatpush1.msra.mxu0 %v249
        %383 = vmatprep.subr.mxu0 0.0
        %384 = vmatpush1.msra.mxu0 %v250
        %385 = vmatprep.mubr.f32.mxu0 %v186
        %386 = vmatmul.mubr.f32.gmra.mrb[0].mxu0 %v185
        %v387 = vpop.f32.mrb[0].mxu0
        %v388 = vadd.f32 %v318, %v387
        %v389 = vpop.f32.mrb[0].mxu0
        %390 = vdwg.mxu0
        %v391 = vmul.f32 %v388, 0.35355338
        %392 = vst [vmem:[%s174] sm:$0xff] %v391
        %s393 = sand.u32 %s75, 1
        %s394 = scalar_lea.sflag [#allocation4], %s393
        %s395 = sand.u32 %s75, 1
        %s396 = smul.addr %s395, 8
        %s397 = scalar_lea.vmem [#allocation7], %s396
        // Predicated region
        $region37: #{tpu_custom_call.1} parent=27 // pred_check
          %p398 = pneg %p85
        $region38: #{tpu_custom_call.1} parent=27 // pred_check_branch
          %400 = sbr.rel (%p398) target = $region40
        $region39: #{tpu_custom_call.1} parent=27 // pred_region
          %s402 = ssub.s32 128, 128
          %403 = vsyncadd %s394, %s402
          %s404 = smul.addr %s20, 128
          %s405 = scalar_lea.hbm %s2, %s404
          %s407 = sshll.u32 %s397, 4
          %s408 = int_to_ptr.vmem [resolvable:$true] %s407
          %410 = dma.vmem_to_hbm [thread:$0]  %s408, 128, %s405, %s394
        $region40: #{tpu_custom_call.1} parent=27 // pred_fallthru
          _
      $region28: #{tpu_custom_call.1} parent=5 // pred_fallthru
        _
      %p411 = scmp.le.s32.totalorder 2, %s15
      // Predicated region
      $region41: #{tpu_custom_call.1} parent=5 // pred_check
        %p412 = pneg %p411
      $region42: #{tpu_custom_call.1} parent=5 // pred_check_branch
        %414 = sbr.rel (%p412) target = $region44
      $region43: #{tpu_custom_call.1} parent=5 // pred_region
        %s415 = ssub.s32 %s15, 2
        // Predicated region
        $region45: #{tpu_custom_call.1} parent=43 // pred_check
          %p416 = pneg %p91
        $region46: #{tpu_custom_call.1} parent=43 // pred_check_branch
          %418 = sbr.rel (%p416) target = $region48
        $region47: #{tpu_custom_call.1} parent=43 // pred_region
          %s419 = sand.u32 %s76, 1
          %s420 = scalar_lea.sflag [#allocation4], %s419
          %s421 = sand.u32 %s76, 1
          %s422 = smul.addr %s421, 8
          %s423 = scalar_lea.vmem [#allocation7], %s422
          %424 = dma.done %s420, 128
        $region48: #{tpu_custom_call.1} parent=43 // pred_fallthru
          _
      $region44: #{tpu_custom_call.1} parent=5 // pred_fallthru
        _
    $region6: #{tpu_custom_call.1} parent=1 // loop_footer
      %s19 = sadd.s32 1, %s15
    $region7: #{tpu_custom_call.1} parent=1 // loop_footer_branch
      %14 = sbr.rel target = $region3
    $region8: #{tpu_custom_call.1} parent=1 // loop_exit
      _
    %425 = vsyncpa [#allocation3], 1
    %s426 = scalar_lea.sflag [#allocation3], 1
    %427 = vsyncpa %s426, 1
    %428 = vsyncpa [#allocation6], 1
    %429 = vsyncpa [#allocation4], 1
    %s430 = scalar_lea.sflag [#allocation4], 1
    %431 = vsyncpa %s430, 1

</llo_original>
